<compile_context>
chip_gen: v6e
topology: v6e:2x2x1
jax: 0.10.0
libtpu: 0.0.40
codegen_flags: <defaults>
</compile_context>

<pallas_src>
import functools

import jax
import jax.numpy as jnp
from jax.experimental import pallas as pl
from jax.experimental.pallas import tpu as pltpu


def _round_up(x, m):
    return ((x + m - 1) // m) * m


def _ntd_loss_kernel(logits_ref, dg_ref, tgt_ref, out_ref, *,
                     inv_tau, kl_scale, batch_size, tile_m):
    i = pl.program_id(0)

    logits = logits_ref[...].astype(jnp.float32)    # (tm, C)
    dg = dg_ref[...].astype(jnp.float32)            # (tm, C)
    tgt = tgt_ref[...]                              # (tm, 1) int32

    tm, c = logits.shape

    # Valid-row mask: the tail tile of a non-divisible batch reads garbage rows, so we
    # must SELECT (jnp.where), not multiply -- NaN * 0 would poison the partial sum.
    row_iota = jax.lax.broadcasted_iota(jnp.int32, (tm, 1), 0)
    valid = (row_iota + i * tile_m) < batch_size                            # (tm, 1)

    # ---------- Cross entropy per row: logsumexp(logits) - logits[target] ----------
    m = jnp.max(logits, axis=-1, keepdims=True)                             # (tm, 1)
    lse = jnp.log(jnp.sum(jnp.exp(logits - m), axis=-1, keepdims=True)) + m
    cls_iota = jax.lax.broadcasted_iota(jnp.int32, (tm, c), 1)
    picked = jnp.sum(jnp.where(cls_iota == tgt, logits, 0.0),
                     axis=-1, keepdims=True)                                # (tm, 1)
    ce_per = lse - picked                                                   # (tm, 1)

    # ---------- Tempered KL per row ----------
    # KL(p || q) with p = softmax(dg/T), log q = log_softmax(logits/T)
    #   = sum_c p_c * (dg_c - logits_c)/T + lse_s - lse_d     (since sum_c p_c == 1)
    m_d = jnp.max(dg, axis=-1, keepdims=True)                               # (tm, 1)
    e_s = jnp.exp((logits - m) * inv_tau)      # reuse CE max: max(x/T) = max(x)/T
    e_d = jnp.exp((dg - m_d) * inv_tau)
    sum_s = jnp.sum(e_s, axis=-1, keepdims=True)
    sum_d = jnp.sum(e_d, axis=-1, keepdims=True)
    lse_s = jnp.log(sum_s) + m * inv_tau
    lse_d = jnp.log(sum_d) + m_d * inv_tau
    diff = (dg - logits) * inv_tau
    cross = jnp.sum(e_d * diff, axis=-1, keepdims=True) / sum_d             # (tm, 1)
    kl_per = cross + lse_s - lse_d                                          # (tm, 1)

    per_row = jnp.where(valid, ce_per + kl_scale * kl_per, 0.0)             # (tm, 1)
    combined = jnp.sum(per_row, keepdims=True)                              # (1, 1)

    # Lane-dense (8, 128) block: partial sum at [0, 0], zeros elsewhere -> the epilogue
    # is an exact dense jnp.sum (no strided gather, no repeated-value rounding).
    r = jax.lax.broadcasted_iota(jnp.int32, out_ref.shape, 0)
    l = jax.lax.broadcasted_iota(jnp.int32, out_ref.shape, 1)
    out_ref[...] = jnp.where((r == 0) & (l == 0), combined, 0.0)


def ntd_loss(logits, targets, dg_logits, *, tau=3.0, beta=1.0, tile_m=None):
    """Computes NTD_Loss.forward(logits, targets, dg_logits) on TPU via Pallas."""
    N, C = logits.shape
    assert dg_logits.shape == (N, C)

    itemsize = max(jnp.dtype(logits.dtype).itemsize,
                   jnp.dtype(dg_logits.dtype).itemsize)

    # ---- generation-aware VMEM budget / limit ----
    try:
        vmem_cap = int(pltpu.get_tpu_info().vmem_capacity_bytes)
    except Exception:
        vmem_cap = 128 * 1024 * 1024
    if vmem_cap <= 64 * 1024 * 1024:                 # v7x-class part (64 MiB physical)
        budget, vmem_limit = 14 * 1024 * 1024, 40 * 1024 * 1024
    else:                                            # v5e / v6e (128 MiB physical)
        budget, vmem_limit = 44 * 1024 * 1024, 96 * 1024 * 1024
    vmem_limit = min(vmem_limit, vmem_cap)

    # ---- row tile sizing ----
    if tile_m is None:
        # 2 streamed inputs x 2 pipeline buffers + ~10 live f32 (tm, C) temporaries.
        per_row_bytes = C * (4 * itemsize + 40) + 64
        tile_m = min(1024, max(8, budget // per_row_bytes))
        tile_m = max(8, (tile_m // 8) * 8)
    tile_m = int(tile_m)
    tile_m = min(tile_m, _round_up(N, 8))            # never bigger than the batch needs
    if N > 8:                                        # keep >= 2 tiles so v7x megacore engages
        tile_m = min(tile_m, _round_up(-(-N // 2), 8))
    tile_m = max(8, (tile_m // 8) * 8)

    num_tiles = -(-N // tile_m)                      # cdiv; last tile masked in-kernel

    tgt2d = targets.astype(jnp.int32).reshape(N, 1)

    kernel = functools.partial(
        _ntd_loss_kernel,
        inv_tau=1.0 / float(tau),
        kl_scale=float(beta) / float(C),
        batch_size=int(N),
        tile_m=tile_m,
    )

    cost = pl.CostEstimate(
        flops=16 * N * C,
        transcendentals=3 * N * C,
        bytes_accessed=2 * N * C * itemsize + N * 4 + num_tiles * 8 * 128 * 4,
    )

    partials = pl.pallas_call(
        kernel,
        out_shape=jax.ShapeDtypeStruct((8 * num_tiles, 128), jnp.float32),
        grid_spec=pltpu.PrefetchScalarGridSpec(
            num_scalar_prefetch=0,
            grid=(num_tiles,),
            in_specs=[
                pl.BlockSpec((tile_m, C), lambda i: (i, 0)),   # full class extent, no pad
                pl.BlockSpec((tile_m, C), lambda i: (i, 0)),
                pl.BlockSpec((tile_m, 1), lambda i: (i, 0)),
            ],
            out_specs=pl.BlockSpec((8, 128), lambda i: (i, 0)),
        ),
        compiler_params=pltpu.CompilerParams(
            dimension_semantics=("parallel",),       # independent tiles across cores
            vmem_limit_bytes=int(vmem_limit),
        ),
        cost_estimate=cost,
    )(logits, dg_logits, tgt2d)

    # Each tile block has its partial at [0,0] and zeros elsewhere -> dense sum is exact.
    return jnp.sum(partials) / N


def _reference_ntd_loss(logits, targets, dg_logits, *, tau=3.0, beta=1.0):
    """Pure-JAX reference matching the PyTorch NTD_Loss semantics."""
    N, C = logits.shape
    logits = logits.astype(jnp.float32)
    dg_logits = dg_logits.astype(jnp.float32)
    # CrossEntropyLoss (mean)
    log_probs = jax.nn.log_softmax(logits, axis=1)
    ce = -jnp.mean(jnp.take_along_axis(log_probs, targets[:, None], axis=1))
    # KLDivLoss(log_softmax(logits/T), softmax(dg/T), reduction='batchmean') / C
    log_q = jax.nn.log_softmax(logits / tau, axis=1)
    p = jax.nn.softmax(dg_logits / tau, axis=1)
    kl = jnp.sum(p * (jnp.log(p) - log_q)) / N
    return ce + beta * (kl / C)


if __name__ == "__main__":
    key = jax.random.PRNGKey(0)

    # Case 1: aligned-ish small shapes.
    k1, k2, k3 = jax.random.split(jax.random.fold_in(key, 0), 3)
    N, C = 16, 32
    logits = jax.random.normal(k1, (N, C), dtype=jnp.float32) * 2.0
    dg_logits = jax.random.normal(k2, (N, C), dtype=jnp.float32) * 2.0
    targets = jax.random.randint(k3, (N,), 0, C, dtype=jnp.int32)

    loss = jax.block_until_ready(ntd_loss(logits, targets, dg_logits, tau=3.0, beta=1.0))
    ref = _reference_ntd_loss(logits, targets, dg_logits, tau=3.0, beta=1.0)
    assert jnp.allclose(loss, ref, rtol=1e-5, atol=1e-5), (loss, ref)

    # Case 2: ragged batch (N % tile_m != 0) and unaligned class dim (C % 128 != 0)
    # exercising the in-kernel tail-row masking with NO wrapper-side padding.
    k1, k2, k3 = jax.random.split(jax.random.fold_in(key, 1), 3)
    N2, C2 = 13, 37
    logits2 = jax.random.normal(k1, (N2, C2), dtype=jnp.float32) * 2.0
    dg_logits2 = jax.random.normal(k2, (N2, C2), dtype=jnp.float32) * 2.0
    targets2 = jax.random.randint(k3, (N2,), 0, C2, dtype=jnp.int32)

    loss2 = jax.block_until_ready(ntd_loss(logits2, targets2, dg_logits2, tau=3.0, beta=1.0))
    ref2 = _reference_ntd_loss(logits2, targets2, dg_logits2, tau=3.0, beta=1.0)
    assert jnp.allclose(loss2, ref2, rtol=1e-5, atol=1e-5), (loss2, ref2)

    print("KERNEL_OK")
</pallas_src>

<mosaic_0001>
module attributes {stable_mosaic.version = 11 : i64} {
  func.func @_ntd_loss_kernel(%arg0: i32, %arg1: memref<8x32xf32, #tpu.memory_space<vmem>>, %arg2: memref<8x32xf32, #tpu.memory_space<vmem>>, %arg3: memref<8x1xi32, #tpu.memory_space<vmem>>, %arg4: memref<8x128xf32, #tpu.memory_space<vmem>>) attributes {dimension_semantics = [#tpu.dimension_semantics<parallel>], iteration_bounds = array<i64: 2>, scalar_prefetch = 0 : i64, scratch_operands = 0 : i64, tpu.core_type = #tpu.core_type<tc>, window_params = [{transform_indices = @transform_0, window_bounds = array<i64: 8, 32>}, {transform_indices = @transform_1, window_bounds = array<i64: 8, 32>}, {transform_indices = @transform_2, window_bounds = array<i64: 8, 1>}, {transform_indices = @transform_3, window_bounds = array<i64: 8, 128>}]} {
    %c0 = arith.constant 0 : index
    %c0_0 = arith.constant 0 : index
    %0 = vector.load %arg1[%c0, %c0_0] : memref<8x32xf32, #tpu.memory_space<vmem>>, vector<8x32xf32>
    %c0_1 = arith.constant 0 : index
    %c0_2 = arith.constant 0 : index
    %1 = vector.load %arg2[%c0_1, %c0_2] : memref<8x32xf32, #tpu.memory_space<vmem>>, vector<8x32xf32>
    %c0_3 = arith.constant 0 : index
    %c0_4 = arith.constant 0 : index
    %2 = vector.load %arg3[%c0_3, %c0_4] : memref<8x1xi32, #tpu.memory_space<vmem>>, vector<8x1xi32>
    %3 = tpu.iota {dimensions = array<i32: 0>} : vector<8x1xi32>
    %c8_i32 = arith.constant 8 : i32
    %4 = arith.muli %arg0, %c8_i32 : i32
    %5 = vector.broadcast %4 : i32 to vector<8x1xi32>
    %6 = arith.addi %3, %5 : vector<8x1xi32>
    %c16_i32 = arith.constant 16 : i32
    %7 = vector.broadcast %c16_i32 : i32 to vector<8x1xi32>
    %8 = arith.cmpi slt, %6, %7 : vector<8x1xi32>
    %cst = arith.constant dense<0xFF800000> : vector<8xf32>
    %9 = vector.multi_reduction <maximumf>, %0, %cst [1] : vector<8x32xf32> to vector<8xf32>
    %10 = vector.shape_cast %9 : vector<8xf32> to vector<8x1xf32>
    %11 = vector.broadcast %10 : vector<8x1xf32> to vector<8x32xf32>
    %12 = arith.subf %0, %11 : vector<8x32xf32>
    %13 = math.exp %12 : vector<8x32xf32>
    %cst_5 = arith.constant dense<0.000000e+00> : vector<8xf32>
    %14 = vector.multi_reduction <add>, %13, %cst_5 [1] : vector<8x32xf32> to vector<8xf32>
    %15 = vector.shape_cast %14 : vector<8xf32> to vector<8x1xf32>
    %16 = math.log %15 : vector<8x1xf32>
    %17 = arith.addf %16, %10 : vector<8x1xf32>
    %18 = tpu.iota {dimensions = array<i32: 1>} : vector<8x32xi32>
    %19 = vector.broadcast %2 : vector<8x1xi32> to vector<8x32xi32>
    %20 = arith.cmpi eq, %18, %19 : vector<8x32xi32>
    %cst_6 = arith.constant 0.000000e+00 : f32
    %21 = vector.broadcast %cst_6 : f32 to vector<8x32xf32>
    %22 = arith.select %20, %0, %21 : vector<8x32xi1>, vector<8x32xf32>
    %cst_7 = arith.constant dense<0.000000e+00> : vector<8xf32>
    %23 = vector.multi_reduction <add>, %22, %cst_7 [1] : vector<8x32xf32> to vector<8xf32>
    %24 = vector.shape_cast %23 : vector<8xf32> to vector<8x1xf32>
    %25 = arith.subf %17, %24 : vector<8x1xf32>
    %cst_8 = arith.constant dense<0xFF800000> : vector<8xf32>
    %26 = vector.multi_reduction <maximumf>, %1, %cst_8 [1] : vector<8x32xf32> to vector<8xf32>
    %27 = vector.shape_cast %26 : vector<8xf32> to vector<8x1xf32>
    %28 = vector.broadcast %10 : vector<8x1xf32> to vector<8x32xf32>
    %29 = arith.subf %0, %28 : vector<8x32xf32>
    %cst_9 = arith.constant 0.333333343 : f32
    %30 = vector.broadcast %cst_9 : f32 to vector<8x32xf32>
    %31 = arith.mulf %29, %30 : vector<8x32xf32>
    %32 = math.exp %31 : vector<8x32xf32>
    %33 = vector.broadcast %27 : vector<8x1xf32> to vector<8x32xf32>
    %34 = arith.subf %1, %33 : vector<8x32xf32>
    %cst_10 = arith.constant 0.333333343 : f32
    %35 = vector.broadcast %cst_10 : f32 to vector<8x32xf32>
    %36 = arith.mulf %34, %35 : vector<8x32xf32>
    %37 = math.exp %36 : vector<8x32xf32>
    %cst_11 = arith.constant dense<0.000000e+00> : vector<8xf32>
    %38 = vector.multi_reduction <add>, %32, %cst_11 [1] : vector<8x32xf32> to vector<8xf32>
    %39 = vector.shape_cast %38 : vector<8xf32> to vector<8x1xf32>
    %cst_12 = arith.constant dense<0.000000e+00> : vector<8xf32>
    %40 = vector.multi_reduction <add>, %37, %cst_12 [1] : vector<8x32xf32> to vector<8xf32>
    %41 = vector.shape_cast %40 : vector<8xf32> to vector<8x1xf32>
    %42 = math.log %39 : vector<8x1xf32>
    %cst_13 = arith.constant 0.333333343 : f32
    %43 = vector.broadcast %cst_13 : f32 to vector<8x1xf32>
    %44 = arith.mulf %10, %43 : vector<8x1xf32>
    %45 = arith.addf %42, %44 : vector<8x1xf32>
    %46 = math.log %41 : vector<8x1xf32>
    %cst_14 = arith.constant 0.333333343 : f32
    %47 = vector.broadcast %cst_14 : f32 to vector<8x1xf32>
    %48 = arith.mulf %27, %47 : vector<8x1xf32>
    %49 = arith.addf %46, %48 : vector<8x1xf32>
    %50 = arith.subf %1, %0 : vector<8x32xf32>
    %cst_15 = arith.constant 0.333333343 : f32
    %51 = vector.broadcast %cst_15 : f32 to vector<8x32xf32>
    %52 = arith.mulf %50, %51 : vector<8x32xf32>
    %53 = arith.mulf %37, %52 : vector<8x32xf32>
    %cst_16 = arith.constant dense<0.000000e+00> : vector<8xf32>
    %54 = vector.multi_reduction <add>, %53, %cst_16 [1] : vector<8x32xf32> to vector<8xf32>
    %55 = vector.shape_cast %54 : vector<8xf32> to vector<8x1xf32>
    %56 = arith.divf %55, %41 : vector<8x1xf32>
    %57 = arith.addf %56, %45 : vector<8x1xf32>
    %58 = arith.subf %57, %49 : vector<8x1xf32>
    %cst_17 = arith.constant 3.125000e-02 : f32
    %59 = vector.broadcast %cst_17 : f32 to vector<8x1xf32>
    %60 = arith.mulf %59, %58 : vector<8x1xf32>
    %61 = arith.addf %25, %60 : vector<8x1xf32>
    %cst_18 = arith.constant 0.000000e+00 : f32
    %62 = vector.broadcast %cst_18 : f32 to vector<8x1xf32>
    %63 = arith.select %8, %61, %62 : vector<8x1xi1>, vector<8x1xf32>
    %64 = vector.shape_cast %63 : vector<8x1xf32> to vector<1x8x1xf32>
    %cst_19 = arith.constant dense<0.000000e+00> : vector<1xf32>
    %65 = vector.multi_reduction <add>, %64, %cst_19 [1, 2] : vector<1x8x1xf32> to vector<1xf32>
    %66 = vector.shape_cast %65 : vector<1xf32> to vector<1x1x1xf32>
    %67 = vector.extract %66[0, 0, 0] : f32 from vector<1x1x1xf32>
    %68 = vector.broadcast %67 : f32 to vector<1x1xf32>
    %69 = tpu.iota {dimensions = array<i32: 0>} : vector<8x128xi32>
    %70 = tpu.iota {dimensions = array<i32: 1>} : vector<8x128xi32>
    %c0_i32 = arith.constant 0 : i32
    %71 = vector.broadcast %c0_i32 : i32 to vector<8x128xi32>
    %72 = arith.cmpi eq, %69, %71 : vector<8x128xi32>
    %c0_i32_20 = arith.constant 0 : i32
    %73 = vector.broadcast %c0_i32_20 : i32 to vector<8x128xi32>
    %74 = arith.cmpi eq, %70, %73 : vector<8x128xi32>
    %75 = arith.andi %72, %74 : vector<8x128xi1>
    %cst_21 = arith.constant 0.000000e+00 : f32
    %76 = vector.shape_cast %68 : vector<1x1xf32> to vector<1x1xf32>
    %77 = vector.broadcast %76 : vector<1x1xf32> to vector<8x128xf32>
    %78 = vector.broadcast %cst_21 : f32 to vector<8x128xf32>
    %79 = arith.select %75, %77, %78 : vector<8x128xi1>, vector<8x128xf32>
    %c0_22 = arith.constant 0 : index
    %c0_23 = arith.constant 0 : index
    %80 = vector.load %arg4[%c0_22, %c0_23] : memref<8x128xf32, #tpu.memory_space<vmem>>, vector<8x128xf32>
    tpu.vector_store %arg4[%c0_22, %c0_23], %79 {strides = array<i32>} : memref<8x128xf32, #tpu.memory_space<vmem>>, vector<8x128xf32>,
    return
  }
  func.func @transform_0(%arg0: i32) -> (i32, i32) {
    %c0_i32 = arith.constant 0 : i32
    %c0_i32_0 = arith.constant 0 : i32
    return %arg0, %c0_i32 : i32, i32
  }
  func.func @transform_1(%arg0: i32) -> (i32, i32) {
    %c0_i32 = arith.constant 0 : i32
    %c0_i32_0 = arith.constant 0 : i32
    return %arg0, %c0_i32 : i32, i32
  }
  func.func @transform_2(%arg0: i32) -> (i32, i32) {
    %c0_i32 = arith.constant 0 : i32
    %c0_i32_0 = arith.constant 0 : i32
    return %arg0, %c0_i32 : i32, i32
  }
  func.func @transform_3(%arg0: i32) -> (i32, i32) {
    %c0_i32 = arith.constant 0 : i32
    %c0_i32_0 = arith.constant 0 : i32
    return %arg0, %c0_i32 : i32, i32
  }
}

</mosaic_0001>

<llo_original>
// kernel: tpu_custom_call.1
$region0: #{tpu_custom_call.1}
  #allocation0 [shape = 'u32[]', space=smem, size = 0x4, offset = 0x4, fixed_abs, tag = 'smem constant byte address 0x4 - core index']
  #allocation1 [shape = 'u32[144,128]{1,0:T(1,128)}', space=vmem, size = 0x12000, scoped, tag = 'internal scratch']
  %s0 = inlined_call_operand.vmem [shape: f32[16,32], index: 0, kind: input, shape index: {}]
  %s1 = inlined_call_operand.hbm [shape: f32[16,32], index: 1, kind: input, shape index: {}]
  %s2 = inlined_call_operand.vmem [shape: s32[16,1], index: 2, kind: input, shape index: {}]
  %s3 = inlined_call_operand.hbm [shape: f32[16,128], index: 3, kind: output, shape index: {}]
  %s4 = sld [smem:[#allocation0]]
  $region49: #{tpu_custom_call.1} parent=0
    _
  %s6 = ssub.s32 1, %s4
  %s7 = scalar_select 0, %s6, %s4
  $region1: #{tpu_custom_call.1} parent=0
    #allocation2 [shape = 'u8[8192]{0}', space=vmem, size = 0x2000, scoped, tag = 'input window, operand 1']
    #allocation3 [shape = 's32[2]{0}', space=sflag, size = 0x8, scoped, tag = 'scoped memory for tpu_custom_call.1']
    #allocation4 [shape = 's32[2]{0}', space=sflag, size = 0x8, scoped, tag = 'scoped memory for tpu_custom_call.1']
    #allocation5 [shape = 'u8[8192]{0}', space=vmem, size = 0x2000, scoped, tag = 'output window, operand 0']
    %8 = vsyncpa [#allocation3], 0
    %s9 = scalar_lea.sflag [#allocation3], 1
    %10 = vsyncpa %s9, 0
    %11 = vsyncpa [#allocation4], 0
    %s12 = scalar_lea.sflag [#allocation4], 1
    %13 = vsyncpa %s12, 0
    loop: start=0, step=1, limit=4
    $region2: #{tpu_custom_call.1} parent=1 // loop_pre_header
      _
    $region3: #{tpu_custom_call.1} parent=1 // loop_header
      %s15 = sphi 0, %s19
      %p16 = scmp.ge.s32.totalorder %s15, 4
      %s25 = sphi 0, %s27
      %s28 = sphi 0, %s25
      %s29 = sphi 0, %s28
      %s45 = sphi 0, %s29
      %s51 = sphi 0, %s53
      %s54 = sphi 0, %s51
      %s55 = sphi 0, %s54
      %s71 = sphi 0, %s55
      %s77 = sphi 0, %s79
      %s80 = sphi 0, %s77
      %s81 = sphi 0, %s80
      %s97 = sphi 0, %s81
      %s103 = sphi 0, %s105
      %s106 = sphi 0, %s103
      %s107 = sphi 0, %s106
      %s123 = sphi 0, %s107
    $region4: #{tpu_custom_call.1} parent=1 // loop_header_branch
      %18 = sbr.rel (%p16) target = $region8
    $region5: #{tpu_custom_call.1} parent=1 // loop_body
      %s20 = ssub.s32 %s15, 1
      %s21 = ssub.s32 %s15, 2
      %s22 = sadd.s32 %s15, 1
      %s23 = ssub.s32 %s15, %s22
      %p24 = scmp.eq.s32.totalorder %s23, 0
      %s26 = sadd.s32 %s25, 1
      %s27 = scalar_select %p24, %s25, %s26
      %p30 = pneg %p24
      %p31 = scmp.eq.s32.totalorder %s15, 1
      %p32 = por %p30, %p31
      %p33 = scmp.ne.s32.totalorder %s25, %s28
      %p34 = scmp.eq.s32.totalorder %s15, 0
      %p35 = por %p33, %p34
      %p36 = scmp.ne.s32.totalorder %s25, %s28
      %p37 = scmp.eq.s32.totalorder %s20, 1
      %p38 = por %p36, %p37
      %p39 = scmp.ne.s32.totalorder %s28, %s29
      %p40 = scmp.eq.s32.totalorder %s20, 0
      %p41 = por %p39, %p40
      %p42 = scmp.ne.s32.totalorder %s28, %s29
      %p43 = scmp.eq.s32.totalorder %s21, 1
      %p44 = por %p42, %p43
      %p46 = scmp.ne.s32.totalorder %s29, %s45
      %p47 = scmp.eq.s32.totalorder %s21, 0
      %p48 = por %p46, %p47
      %s49 = ssub.s32 %s15, %s22
      %p50 = scmp.eq.s32.totalorder %s49, 0
      %s52 = sadd.s32 %s51, 1
      %s53 = scalar_select %p50, %s51, %s52
      %p56 = pneg %p50
      %p57 = scmp.eq.s32.totalorder %s15, 1
      %p58 = por %p56, %p57
      %p59 = scmp.ne.s32.totalorder %s51, %s54
      %p60 = scmp.eq.s32.totalorder %s15, 0
      %p61 = por %p59, %p60
      %p62 = scmp.ne.s32.totalorder %s51, %s54
      %p63 = scmp.eq.s32.totalorder %s20, 1
      %p64 = por %p62, %p63
      %p65 = scmp.ne.s32.totalorder %s54, %s55
      %p66 = scmp.eq.s32.totalorder %s20, 0
      %p67 = por %p65, %p66
      %p68 = scmp.ne.s32.totalorder %s54, %s55
      %p69 = scmp.eq.s32.totalorder %s21, 1
      %p70 = por %p68, %p69
      %p72 = scmp.ne.s32.totalorder %s55, %s71
      %p73 = scmp.eq.s32.totalorder %s21, 0
      %p74 = por %p72, %p73
      %s75 = ssub.s32 %s15, %s22
      %p76 = scmp.eq.s32.totalorder %s75, 0
      %s78 = sadd.s32 %s77, 1
      %s79 = scalar_select %p76, %s77, %s78
      %p82 = pneg %p76
      %p83 = scmp.eq.s32.totalorder %s15, 1
      %p84 = por %p82, %p83
      %p85 = scmp.ne.s32.totalorder %s77, %s80
      %p86 = scmp.eq.s32.totalorder %s15, 0
      %p87 = por %p85, %p86
      %p88 = scmp.ne.s32.totalorder %s77, %s80
      %p89 = scmp.eq.s32.totalorder %s20, 1
      %p90 = por %p88, %p89
      %p91 = scmp.ne.s32.totalorder %s80, %s81
      %p92 = scmp.eq.s32.totalorder %s20, 0
      %p93 = por %p91, %p92
      %p94 = scmp.ne.s32.totalorder %s80, %s81
      %p95 = scmp.eq.s32.totalorder %s21, 1
      %p96 = por %p94, %p95
      %p98 = scmp.ne.s32.totalorder %s81, %s97
      %p99 = scmp.eq.s32.totalorder %s21, 0
      %p100 = por %p98, %p99
      %s101 = ssub.s32 %s15, %s22
      %p102 = scmp.eq.s32.totalorder %s101, 0
      %s104 = sadd.s32 %s103, 1
      %s105 = scalar_select %p102, %s103, %s104
      %p108 = pneg %p102
      %p109 = scmp.eq.s32.totalorder %s15, 1
      %p110 = por %p108, %p109
      %p111 = scmp.ne.s32.totalorder %s103, %s106
      %p112 = scmp.eq.s32.totalorder %s15, 0
      %p113 = por %p111, %p112
      %p114 = scmp.ne.s32.totalorder %s103, %s106
      %p115 = scmp.eq.s32.totalorder %s20, 1
      %p116 = por %p114, %p115
      %p117 = scmp.ne.s32.totalorder %s106, %s107
      %p118 = scmp.eq.s32.totalorder %s20, 0
      %p119 = por %p117, %p118
      %p120 = scmp.ne.s32.totalorder %s106, %s107
      %p121 = scmp.eq.s32.totalorder %s21, 1
      %p122 = por %p120, %p121
      %p124 = scmp.ne.s32.totalorder %s107, %s123
      %p125 = scmp.eq.s32.totalorder %s21, 0
      %p126 = por %p124, %p125
      %p127 = scmp.le.s32.totalorder 1, %s15
      %p128 = scmp.lt.s32.totalorder %s15, 3
      %p129 = pnand %p127, %p128
      %p130 = pneg %p129
      // Predicated region
      $region9: #{tpu_custom_call.1} parent=5 // pred_check
        _
      $region10: #{tpu_custom_call.1} parent=5 // pred_check_branch
        %132 = sbr.rel (%p129) target = $region12
      $region11: #{tpu_custom_call.1} parent=5 // pred_region
        %s133 = ssub.s32 %s15, 1
      $region12: #{tpu_custom_call.1} parent=5 // pred_fallthru
        _
      %p134 = scmp.lt.s32.totalorder %s15, 2
      // Predicated region
      $region13: #{tpu_custom_call.1} parent=5 // pred_check
        %p135 = pneg %p134
      $region14: #{tpu_custom_call.1} parent=5 // pred_check_branch
        %137 = sbr.rel (%p135) target = $region16
      $region15: #{tpu_custom_call.1} parent=5 // pred_region
        // Predicated region
        $region17: #{tpu_custom_call.1} parent=15 // pred_check
          %p138 = pneg %p35
        $region18: #{tpu_custom_call.1} parent=15 // pred_check_branch
          %140 = sbr.rel (%p138) target = $region20
        $region19: #{tpu_custom_call.1} parent=15 // pred_region
          %p141 = scmp.lt.s32.totalorder %s15, 1
          %s142 = scalar_select %p141, %s15, 1
          %s143 = smul.addr %s142, 8
          %s144 = scalar_lea.vmem %s0, %s143
        $region20: #{tpu_custom_call.1} parent=15 // pred_fallthru
          _
        // Predicated region
        $region21: #{tpu_custom_call.1} parent=15 // pred_check
          %p145 = pneg %p61
        $region22: #{tpu_custom_call.1} parent=15 // pred_check_branch
          %147 = sbr.rel (%p145) target = $region24
        $region23: #{tpu_custom_call.1} parent=15 // pred_region
          %s148 = sand.u32 %s51, 1
          %s149 = scalar_lea.sflag [#allocation3], %s148
          %s150 = sand.u32 %s51, 1
          %s151 = smul.addr %s150, 8
          %s152 = scalar_lea.vmem [#allocation2], %s151
          %s154 = ssub.s32 128, 128
          %155 = vsyncadd %s149, %s154
          %s156 = smul.addr %s15, 128
          %s157 = scalar_lea.hbm %s1, %s156
          %s159 = sshll.u32 %s152, 4
          %s160 = int_to_ptr.vmem [resolvable:$true] %s159
          %162 = dma.hbm_to_vmem [thread:$0]  %s157, 128, %s160, %s149
        $region24: #{tpu_custom_call.1} parent=15 // pred_fallthru
          _
        // Predicated region
        $region25: #{tpu_custom_call.1} parent=15 // pred_check
          %p163 = pneg %p87
        $region26: #{tpu_custom_call.1} parent=15 // pred_check_branch
          %165 = sbr.rel (%p163) target = $region28
        $region27: #{tpu_custom_call.1} parent=15 // pred_region
          %p166 = scmp.lt.s32.totalorder %s15, 1
          %s167 = scalar_select %p166, %s15, 1
          %s168 = smul.addr %s167, 8
          %s169 = scalar_lea.vmem %s2, %s168
        $region28: #{tpu_custom_call.1} parent=15 // pred_fallthru
          _
      $region16: #{tpu_custom_call.1} parent=5 // pred_fallthru
        _
      %p170 = scmp.le.s32.totalorder 1, %s15
      %p171 = scmp.lt.s32.totalorder %s15, 3
      %p172 = pnand %p170, %p171
      %p173 = pneg %p172
      // Predicated region
      $region29: #{tpu_custom_call.1} parent=5 // pred_check
        _
      $region30: #{tpu_custom_call.1} parent=5 // pred_check_branch
        %175 = sbr.rel (%p172) target = $region32
      $region31: #{tpu_custom_call.1} parent=5 // pred_region
        %s176 = ssub.s32 %s15, 1
        %s177 = sand.u32 %s54, 1
        %s178 = scalar_lea.sflag [#allocation3], %s177
        %s179 = sand.u32 %s54, 1
        %s180 = smul.addr %s179, 8
        %s181 = scalar_lea.vmem [#allocation2], %s180
        // Predicated region
        $region33: #{tpu_custom_call.1} parent=31 // pred_check
          %p182 = pneg %p67
        $region34: #{tpu_custom_call.1} parent=31 // pred_check_branch
          %184 = sbr.rel (%p182) target = $region36
        $region35: #{tpu_custom_call.1} parent=31 // pred_region
          %185 = dma.done %s178, 128
        $region36: #{tpu_custom_call.1} parent=31 // pred_fallthru
          _
        %p186 = scmp.lt.s32.totalorder %s20, 1
        %s187 = scalar_select %p186, %s20, 1
        %s188 = smul.addr %s187, 8
        %s189 = scalar_lea.vmem %s0, %s188
        %p190 = pneg %p41
        %p191 = pneg %p38
        %s192 = sand.u32 %s54, 1
        %s193 = scalar_lea.sflag [#allocation3], %s192
        %s194 = sand.u32 %s54, 1
        %s195 = smul.addr %s194, 8
        %s196 = scalar_lea.vmem [#allocation2], %s195
        %p197 = pneg %p67
        %p198 = pneg %p64
        %p199 = scmp.lt.s32.totalorder %s20, 1
        %s200 = scalar_select %p199, %s20, 1
        %s201 = smul.addr %s200, 8
        %s202 = scalar_lea.vmem %s2, %s201
        %p203 = pneg %p93
        %p204 = pneg %p90
        %p205 = pneg %p119
        %p206 = pneg %p116
        %s207 = sand.u32 %s106, 1
        %s208 = scalar_lea.sflag [#allocation4], %s207
        %s209 = sand.u32 %s106, 1
        %s210 = smul.addr %s209, 8
        %s211 = scalar_lea.vmem [#allocation5], %s210
        %p212 = scmp.lt.s32.totalorder %s20, 1
        %s213 = scalar_select %p212, %s20, 1
        %s214 = smul.addr %s213, 8
        %s215 = scalar_lea.vmem %s0, %s214
        %p216 = scmp.lt.s32.totalorder %s20, 1
        %s217 = scalar_select %p216, %s20, 1
        %s218 = smul.addr %s217, 8
        %s219 = scalar_lea.vmem %s2, %s218
        %v220 = vld [vmem:[%s215] sm:$0xff]
        %v221 = vld [vmem:[%s181] sm:$0xff]
        %v222 = vld [vmem:[%s219] sm:$0xff]
        %v223 = vlaneseq
        %v224 = vshrl.u32 %v223, 7
        %s225 = smul.u32 %s20, 8
        %v226 = vstv %s225
        %v227 = vadd.s32 %v224, %v226
        %vm228 = vcmp.lt.s32.totalorder %v227, 16
        %vm229 = vcmask 261120
        %v230 = vsel %vm229, %v220, -inf
        %231 = vmax.xlane.f32.xlu0 %v230
        %v232 = vpop.xlane.xlu0 %231
        %v233 = vsub.f32 %v220, %v232
        %v234 = vmul.f32 %v233, 1.442695
        %v235 = vpow.pop %v234
        %v236 = vsel %vm229, %v235, 0.0
        %237 = vadd.xlane.f32.xlu0 %v236
        %v238 = vpop.xlane.xlu0 %237
        %v239 = vlog2.pop %v238
        %v240 = vmul.f32 %v239, 0.6931472
        %v241 = vadd.f32 %v240, %v232
        %v242 = vlaneseq
        %v243 = vand.u32 %v242, 127
        %244 = vset.pattern.permute.xlu0 0
        %245 = vperm.xlu0 %244, %v222
        %v246 = vpop.permute.xlu0 %245
        %vm247 = vcmp.eq.s32.totalorder %v243, %v246
        %v248 = vsel %vm247, %v220, 0.0
        %v249 = vsel %vm229, %v248, 0.0
        %250 = vadd.xlane.f32.xlu0 %v249
        %v251 = vpop.xlane.xlu0 %250
        %v252 = vsub.f32 %v241, %v251
        %v253 = vsel %vm229, %v221, -inf
        %254 = vmax.xlane.f32.xlu0 %v253
        %v255 = vpop.xlane.xlu0 %254
        %v256 = vmul.f32 %v233, 0.33333334
        %v257 = vmul.f32 %v256, 1.442695
        %v258 = vpow.pop %v257
        %v259 = vsub.f32 %v221, %v255
        %v260 = vmul.f32 %v259, 0.33333334
        %v261 = vmul.f32 %v260, 1.442695
        %v262 = vpow.pop %v261
        %v263 = vsel %vm229, %v258, 0.0
        %264 = vadd.xlane.f32.xlu0 %v263
        %v265 = vpop.xlane.xlu0 %264
        %v266 = vsel %vm229, %v262, 0.0
        %267 = vadd.xlane.f32.xlu0 %v266
        %v268 = vpop.xlane.xlu0 %267
        %v269 = vlog2.pop %v265
        %v270 = vmul.f32 %v269, 0.6931472
        %v271 = vmul.f32 %v232, 0.33333334
        %v272 = vadd.f32 %v270, %v271
        %v273 = vlog2.pop %v268
        %v274 = vmul.f32 %v273, 0.6931472
        %v275 = vmul.f32 %v255, 0.33333334
        %v276 = vadd.f32 %v274, %v275
        %v277 = vsub.f32 %v221, %v220
        %v278 = vmul.f32 %v277, 0.33333334
        %v279 = vmul.f32 %v262, %v278
        %v280 = vsel %vm229, %v279, 0.0
        %281 = vadd.xlane.f32.xlu0 %v280
        %v282 = vpop.xlane.xlu0 %281
        %v283 = vrcp.pop %v268
        %v284 = vmul.f32 %v282, %v283
        %v285 = vadd.f32 %v284, %v272
        %v286 = vsub.f32 %v285, %v276
        %v287 = vmul.f32 %v286, 0.03125
        %v288 = vadd.f32 %v252, %v287
        %v289 = vsel %vm228, %v288, 0.0
        %vm290 = vcmask 7168
        %v291 = vsel %vm290, %v289, 0.0
        %292 = vadd.xlane.f32.xlu0 %v291
        %v293 = vpop.xlane.xlu0 %292
        %v294 = vrot.slane %v293, 4
        %v295 = vadd.f32 %v293, %v294
        %v296 = vrot.slane %v295, 2
        %v297 = vadd.f32 %v295, %v296
        %v298 = vrot.slane %v297, 1
        %v299 = vadd.f32 %v297, %v298
        %s300 = vtos %v299
        %vm301 = vcmp.eq.s32.totalorder %v224, 0
        %vm302 = vcmp.eq.s32.totalorder %v243, 0
        %vm303 = vmand %vm301, %vm302
        %v304 = vstv %s300
        %v305 = vsel %vm303, %v304, 0.0
        %306 = vst [vmem:[%s211] sm:$0xff] %v305
        %s307 = sand.u32 %s106, 1
        %s308 = scalar_lea.sflag [#allocation4], %s307
        %s309 = sand.u32 %s106, 1
        %s310 = smul.addr %s309, 8
        %s311 = scalar_lea.vmem [#allocation5], %s310
        // Predicated region
        $region37: #{tpu_custom_call.1} parent=31 // pred_check
          %p312 = pneg %p116
        $region38: #{tpu_custom_call.1} parent=31 // pred_check_branch
          %314 = sbr.rel (%p312) target = $region40
        $region39: #{tpu_custom_call.1} parent=31 // pred_region
          %s316 = ssub.s32 128, 128
          %317 = vsyncadd %s308, %s316
          %s318 = smul.addr %s20, 128
          %s319 = scalar_lea.hbm %s3, %s318
          %s321 = sshll.u32 %s311, 4
          %s322 = int_to_ptr.vmem [resolvable:$true] %s321
          %324 = dma.vmem_to_hbm [thread:$0]  %s322, 128, %s319, %s308
        $region40: #{tpu_custom_call.1} parent=31 // pred_fallthru
          _
      $region32: #{tpu_custom_call.1} parent=5 // pred_fallthru
        _
      %p325 = scmp.le.s32.totalorder 2, %s15
      // Predicated region
      $region41: #{tpu_custom_call.1} parent=5 // pred_check
        %p326 = pneg %p325
      $region42: #{tpu_custom_call.1} parent=5 // pred_check_branch
        %328 = sbr.rel (%p326) target = $region44
      $region43: #{tpu_custom_call.1} parent=5 // pred_region
        %s329 = ssub.s32 %s15, 2
        // Predicated region
        $region45: #{tpu_custom_call.1} parent=43 // pred_check
          %p330 = pneg %p122
        $region46: #{tpu_custom_call.1} parent=43 // pred_check_branch
          %332 = sbr.rel (%p330) target = $region48
        $region47: #{tpu_custom_call.1} parent=43 // pred_region
          %s333 = sand.u32 %s107, 1
          %s334 = scalar_lea.sflag [#allocation4], %s333
          %s335 = sand.u32 %s107, 1
          %s336 = smul.addr %s335, 8
          %s337 = scalar_lea.vmem [#allocation5], %s336
          %338 = dma.done %s334, 128
        $region48: #{tpu_custom_call.1} parent=43 // pred_fallthru
          _
      $region44: #{tpu_custom_call.1} parent=5 // pred_fallthru
        _
    $region6: #{tpu_custom_call.1} parent=1 // loop_footer
      %s19 = sadd.s32 1, %s15
    $region7: #{tpu_custom_call.1} parent=1 // loop_footer_branch
      %14 = sbr.rel target = $region3
    $region8: #{tpu_custom_call.1} parent=1 // loop_exit
      _
    %339 = vsyncpa [#allocation3], 1
    %s340 = scalar_lea.sflag [#allocation3], 1
    %341 = vsyncpa %s340, 1
    %342 = vsyncpa [#allocation4], 1
    %s343 = scalar_lea.sflag [#allocation4], 1
    %344 = vsyncpa %s343, 1

</llo_original>
